<compile_context>
chip_gen: v7x
topology: tpu7x:2x2x1
jax: 0.10.0
libtpu: 0.0.40
codegen_flags: <defaults>
</compile_context>

<pallas_src>
import math

import jax
import jax.numpy as jnp
from jax.experimental import pallas as pl
from jax.experimental.pallas import tpu as pltpu


# ----------------------------- tiling config --------------------------------
_TM = 256          # output rows per tile   (multiple of 8 and of 128/256)
_TN = 256          # output cols per tile   (multiple of 128/256)
_TK = 512          # contraction chunk      (multiple of 128)
_SMALL_MAT_BYTES = 1 << 20     # per-matrix threshold for the batched path
_SMALL_BLOCK_BUDGET = 4 << 20  # VMEM budget for one batched block (a+b+o)


def _round_up(x, m):
    return ((x + m - 1) // m) * m


# ----------------------------- kernels ---------------------------------------
def _bmm_tiled_kernel(a_ref, b_ref, o_ref, acc_ref):
    # a_ref: (tm, tk), b_ref: (tk, tn), o_ref: (tm, tn); batch dim squeezed.
    @pl.when(pl.program_id(3) == 0)
    def _():
        acc_ref[...] = jnp.zeros_like(acc_ref)

    acc_ref[...] += jnp.dot(a_ref[...], b_ref[...],
                            preferred_element_type=jnp.float32)

    @pl.when(pl.program_id(3) == pl.num_programs(3) - 1)
    def _():
        o_ref[...] = acc_ref[...].astype(o_ref.dtype)


def _bmm_block_kernel(a_ref, b_ref, o_ref):
    # a_ref: (BB, N, K), b_ref: (BB, K, M), o_ref: (BB, N, M)
    acc = jnp.einsum("bnk,bkm->bnm", a_ref[...], b_ref[...],
                     preferred_element_type=jnp.float32)
    o_ref[...] = acc.astype(o_ref.dtype)


# ----------------------------- drivers ---------------------------------------
def _tiled_matmul(a, b, out_dtype):
    """a: (B, N, K), b: (B, K, M) -> (B, N, M), M/N/K-tiled with f32 acc."""
    B, N, K = a.shape
    M = b.shape[-1]

    tm = min(_TM, _round_up(N, 8))
    tn = min(_TN, _round_up(M, 128))
    tk = min(_TK, _round_up(K, 128))
    Np, Kp, Mp = _round_up(N, tm), _round_up(K, tk), _round_up(M, tn)

    if (Np, Kp) != (N, K):
        a = jnp.pad(a, ((0, 0), (0, Np - N), (0, Kp - K)))
    if (Kp, Mp) != (K, M):
        b = jnp.pad(b, ((0, 0), (0, Kp - K), (0, Mp - M)))

    grid = (B, Np // tm, Mp // tn, Kp // tk)
    bytes_accessed = (a.size * a.dtype.itemsize + b.size * b.dtype.itemsize
                      + B * Np * Mp * jnp.dtype(out_dtype).itemsize)

    out = pl.pallas_call(
        _bmm_tiled_kernel,
        out_shape=jax.ShapeDtypeStruct((B, Np, Mp), out_dtype),
        grid_spec=pltpu.PrefetchScalarGridSpec(
            num_scalar_prefetch=0,
            grid=grid,
            in_specs=[
                pl.BlockSpec((pl.Squeezed(), tm, tk),
                             lambda bb, i, j, k: (bb, i, k)),
                pl.BlockSpec((pl.Squeezed(), tk, tn),
                             lambda bb, i, j, k: (bb, k, j)),
            ],
            out_specs=pl.BlockSpec((pl.Squeezed(), tm, tn),
                                   lambda bb, i, j, k: (bb, i, j)),
            scratch_shapes=[pltpu.VMEM((tm, tn), jnp.float32)],
        ),
        compiler_params=pltpu.CompilerParams(
            dimension_semantics=("parallel", "parallel", "parallel",
                                 "arbitrary"),
        ),
        cost_estimate=pl.CostEstimate(flops=2 * B * N * M * K,
                                      transcendentals=0,
                                      bytes_accessed=bytes_accessed),
    )(a, b)

    if (Np, Mp) != (N, M):
        out = out[:, :N, :M]
    return out


def _batched_small_matmul(a, b, out_dtype):
    """a: (B, N, K), b: (B, K, M) -> (B, N, M); folds BB matrices per step."""
    B, N, K = a.shape
    M = b.shape[-1]

    per_mat = (a.dtype.itemsize * N * K + b.dtype.itemsize * K * M
               + jnp.dtype(out_dtype).itemsize * N * M)
    bb_max = max(1, min(B, _SMALL_BLOCK_BUDGET // max(per_mat, 1)))
    steps = pl.cdiv(B, bb_max)
    BB = pl.cdiv(B, steps)            # minimizes padding while <= bb_max
    Bp = _round_up(B, BB)

    if Bp != B:
        a = jnp.pad(a, ((0, Bp - B), (0, 0), (0, 0)))
        b = jnp.pad(b, ((0, Bp - B), (0, 0), (0, 0)))

    bytes_accessed = (a.size * a.dtype.itemsize + b.size * b.dtype.itemsize
                      + Bp * N * M * jnp.dtype(out_dtype).itemsize)

    out = pl.pallas_call(
        _bmm_block_kernel,
        out_shape=jax.ShapeDtypeStruct((Bp, N, M), out_dtype),
        grid_spec=pltpu.PrefetchScalarGridSpec(
            num_scalar_prefetch=0,
            grid=(Bp // BB,),
            in_specs=[
                pl.BlockSpec((BB, N, K), lambda i: (i, 0, 0)),
                pl.BlockSpec((BB, K, M), lambda i: (i, 0, 0)),
            ],
            out_specs=pl.BlockSpec((BB, N, M), lambda i: (i, 0, 0)),
        ),
        compiler_params=pltpu.CompilerParams(
            dimension_semantics=("parallel",),
        ),
        cost_estimate=pl.CostEstimate(flops=2 * B * N * M * K,
                                      transcendentals=0,
                                      bytes_accessed=bytes_accessed),
    )(a, b)

    return out[:B] if Bp != B else out


def _matmul_impl(a, b, out_dtype):
    _, N, K = a.shape
    M = b.shape[-1]
    per_mat = (a.dtype.itemsize * N * K + b.dtype.itemsize * K * M
               + jnp.dtype(out_dtype).itemsize * N * M)
    if per_mat <= _SMALL_MAT_BYTES:
        return _batched_small_matmul(a, b, out_dtype)
    return _tiled_matmul(a, b, out_dtype)


def pallas_matmul(x1, x2):
    """Equivalent of torch's `x1 @ x2` for >=2-D float inputs."""
    assert x1.ndim >= 2 and x2.ndim >= 2, "1-D operands not supported"
    assert x1.shape[-1] == x2.shape[-2], "contraction dims must match"

    out_dtype = jnp.result_type(x1.dtype, x2.dtype)
    N, K = x1.shape[-2:]
    M = x2.shape[-1]
    b1, b2 = x1.shape[:-2], x2.shape[:-2]

    # Batched activations @ plain 2-D weight: fold batch into rows so the MXU
    # sees one tall, sublane-dense matmul against a single weight tile.
    if b2 == () and b1 != ():
        B = math.prod(b1)
        out = _matmul_impl(x1.reshape(1, B * N, K),
                           x2.reshape(1, K, M), out_dtype)
        return out.reshape(*b1, N, M)

    batch = jnp.broadcast_shapes(b1, b2)
    a = jnp.broadcast_to(x1, batch + (N, K))
    b = jnp.broadcast_to(x2, batch + (K, M))
    B = math.prod(batch) if batch else 1
    out = _matmul_impl(a.reshape(B, N, K), b.reshape(B, K, M), out_dtype)
    if batch:
        return out.reshape(*batch, N, M)
    return out.reshape(N, M)


# ----------------------------- demo / check ----------------------------------
if __name__ == "__main__":
    key = jax.random.PRNGKey(0)
    k1, k2, k3, k4, k5 = jax.random.split(key, 5)
    hi = jax.lax.Precision.HIGHEST

    # 1) Attention-shaped batched matmul (small matrices -> batched block path)
    B, H, S, D = 2, 4, 8, 32
    q = jax.random.normal(k1, (B, H, S, D), dtype=jnp.float32)
    kT = jax.random.normal(k2, (B, H, D, S), dtype=jnp.float32)
    out1 = jax.block_until_ready(pallas_matmul(q, kT))
    ref1 = jnp.matmul(q, kT, precision=hi)
    assert out1.shape == ref1.shape
    assert jnp.allclose(out1, ref1, atol=1e-4, rtol=1e-4)

    # 2) Batched activations @ 2-D weight (batch folded into rows)
    w = jax.random.normal(k3, (D, 16), dtype=jnp.float32)
    out2 = jax.block_until_ready(pallas_matmul(q, w))
    ref2 = jnp.matmul(q, w, precision=hi)
    assert out2.shape == ref2.shape
    assert jnp.allclose(out2, ref2, atol=1e-4, rtol=1e-4)

    # 3) Larger 2-D matmul (exercises the tiled M/N/K path + f32 accumulator)
    a = jax.random.normal(k4, (256, 384), dtype=jnp.float32)
    b = jax.random.normal(k5, (384, 512), dtype=jnp.float32)
    out3 = jax.block_until_ready(pallas_matmul(a, b))
    ref3 = jnp.matmul(a, b, precision=hi)
    assert out3.shape == ref3.shape
    assert jnp.allclose(out3, ref3, atol=1e-3, rtol=1e-4)

    print("KERNEL_OK")
</pallas_src>

<mosaic_0001>
module attributes {stable_mosaic.version = 11 : i64} {
  func.func @_bmm_block_kernel(%arg0: i32, %arg1: memref<8x8x32xf32, #tpu.memory_space<vmem>>, %arg2: memref<8x32x8xf32, #tpu.memory_space<vmem>>, %arg3: memref<8x8x8xf32, #tpu.memory_space<vmem>>) attributes {dimension_semantics = [#tpu.dimension_semantics<parallel>], iteration_bounds = array<i64: 1>, scalar_prefetch = 0 : i64, scratch_operands = 0 : i64, tpu.core_type = #tpu.core_type<tc>, window_params = [{transform_indices = @transform_0, window_bounds = array<i64: 8, 8, 32>}, {transform_indices = @transform_1, window_bounds = array<i64: 8, 32, 8>}, {transform_indices = @transform_2, window_bounds = array<i64: 8, 8, 8>}]} {
    %c0 = arith.constant 0 : index
    %c0_0 = arith.constant 0 : index
    %c0_1 = arith.constant 0 : index
    %0 = vector.load %arg1[%c0, %c0_0, %c0_1] : memref<8x8x32xf32, #tpu.memory_space<vmem>>, vector<8x8x32xf32>
    %c0_2 = arith.constant 0 : index
    %c0_3 = arith.constant 0 : index
    %c0_4 = arith.constant 0 : index
    %1 = vector.load %arg2[%c0_2, %c0_3, %c0_4] : memref<8x32x8xf32, #tpu.memory_space<vmem>>, vector<8x32x8xf32>
    "tpu.trace_start"() <{level = 10 : i32, message = "bnk,bkm->bnm"}> : () -> ()
    %cst = arith.constant dense<0.000000e+00> : vector<8x8x8xf32>
    %2 = tpu.matmul %0, %1, %cst {dimension_numbers = #tpu.dot_dimension_numbers<[2], [1], [1], [2], [0, 0, 0, 1, 1, 2], [0], [0]>} : vector<8x8x32xf32>, vector<8x32x8xf32>, vector<8x8x8xf32> -> vector<8x8x8xf32>
    "tpu.trace_stop"() : () -> ()
    %c0_5 = arith.constant 0 : index
    %c0_6 = arith.constant 0 : index
    %c0_7 = arith.constant 0 : index
    %3 = vector.load %arg3[%c0_5, %c0_6, %c0_7] : memref<8x8x8xf32, #tpu.memory_space<vmem>>, vector<8x8x8xf32>
    tpu.vector_store %arg3[%c0_5, %c0_6, %c0_7], %2 {strides = array<i32>} : memref<8x8x8xf32, #tpu.memory_space<vmem>>, vector<8x8x8xf32>,
    return
  }
  func.func @transform_0(%arg0: i32) -> (i32, i32, i32) {
    %c0_i32 = arith.constant 0 : i32
    %c0_i32_0 = arith.constant 0 : i32
    %c0_i32_1 = arith.constant 0 : i32
    return %arg0, %c0_i32, %c0_i32_0 : i32, i32, i32
  }
  func.func @transform_1(%arg0: i32) -> (i32, i32, i32) {
    %c0_i32 = arith.constant 0 : i32
    %c0_i32_0 = arith.constant 0 : i32
    %c0_i32_1 = arith.constant 0 : i32
    return %arg0, %c0_i32, %c0_i32_0 : i32, i32, i32
  }
  func.func @transform_2(%arg0: i32) -> (i32, i32, i32) {
    %c0_i32 = arith.constant 0 : i32
    %c0_i32_0 = arith.constant 0 : i32
    %c0_i32_1 = arith.constant 0 : i32
    return %arg0, %c0_i32, %c0_i32_0 : i32, i32, i32
  }
}

</mosaic_0001>

<llo_original>
// kernel: tpu_custom_call.1
$region0: #{tpu_custom_call.1}
  #allocation0 [shape = 'u32[]', space=smem, size = 0x4, offset = 0x4, fixed_abs, tag = 'smem constant byte address 0x4 - core index']
  #allocation1 [shape = 'u32[144,128]{1,0:T(1,128)}', space=vmem, size = 0x12000, scoped, tag = 'internal scratch']
  %s0 = inlined_call_operand.vmem [shape: f32[8,8,32], index: 0, kind: input, shape index: {}]
  %s1 = inlined_call_operand.vmem [shape: f32[8,32,8], index: 1, kind: input, shape index: {}]
  %s2 = inlined_call_operand.hbm [shape: f32[8,8,8], index: 2, kind: output, shape index: {}]
  %s3 = sld [smem:[#allocation0]]
  $region18: #{tpu_custom_call.1} parent=0
    _
  %s5 = ssub.s32 1, %s3
  %s6 = scalar_select 0, %s5, %s3
  $region1: #{tpu_custom_call.1} parent=0
    #allocation2 [shape = 'u8[32768]{0}', space=vmem, size = 0x8000, scoped, tag = 'output window, operand 0, single buffered']
    #allocation3 [shape = 's32[1]{0}', space=sflag, size = 0x4, scoped, tag = 'scoped memory for tpu_custom_call.1']
    %7 = vsyncpa [#allocation3], 0
    // Predicated region
    $region2: #{tpu_custom_call.1} parent=1 // pred_check
      _
    $region3: #{tpu_custom_call.1} parent=1 // pred_check_branch
      %9 = sbr.rel (0) target = $region5
    $region4: #{tpu_custom_call.1} parent=1 // pred_region
      _
    $region5: #{tpu_custom_call.1} parent=1 // pred_fallthru
      _
    // Predicated region
    $region6: #{tpu_custom_call.1} parent=1 // pred_check
      _
    $region7: #{tpu_custom_call.1} parent=1 // pred_check_branch
      %11 = sbr.rel (0) target = $region9
    $region8: #{tpu_custom_call.1} parent=1 // pred_region
      _
    $region9: #{tpu_custom_call.1} parent=1 // pred_fallthru
      _
    %v12 = vld [vmem:[%s0] sm:$0xff]
    %v13 = vld [vmem:[%s0 + $0x8] sm:$0xff]
    %v14 = vld [vmem:[%s0 + $0x10] sm:$0xff]
    %v15 = vld [vmem:[%s0 + $0x18] sm:$0xff]
    %v16 = vld [vmem:[%s0 + $0x20] sm:$0xff]
    %v17 = vld [vmem:[%s0 + $0x28] sm:$0xff]
    %v18 = vld [vmem:[%s0 + $0x30] sm:$0xff]
    %v19 = vld [vmem:[%s0 + $0x38] sm:$0xff]
    %v20 = vld [vmem:[%s1] sm:$0xff]
    %v21 = vld [vmem:[%s1 + $0x8] sm:$0xff]
    %v22 = vld [vmem:[%s1 + $0x10] sm:$0xff]
    %v23 = vld [vmem:[%s1 + $0x18] sm:$0xff]
    %v24 = vld [vmem:[%s1 + $0x20] sm:$0xff]
    %v25 = vld [vmem:[%s1 + $0x28] sm:$0xff]
    %v26 = vld [vmem:[%s1 + $0x30] sm:$0xff]
    %v27 = vld [vmem:[%s1 + $0x38] sm:$0xff]
    %v28 = vld [vmem:[%s1 + $0x40] sm:$0xff]
    %v29 = vld [vmem:[%s1 + $0x48] sm:$0xff]
    %v30 = vld [vmem:[%s1 + $0x50] sm:$0xff]
    %v31 = vld [vmem:[%s1 + $0x58] sm:$0xff]
    %v32 = vld [vmem:[%s1 + $0x60] sm:$0xff]
    %v33 = vld [vmem:[%s1 + $0x68] sm:$0xff]
    %v34 = vld [vmem:[%s1 + $0x70] sm:$0xff]
    %v35 = vld [vmem:[%s1 + $0x78] sm:$0xff]
    %v36 = vld [vmem:[%s1 + $0x80] sm:$0xff]
    %v37 = vld [vmem:[%s1 + $0x88] sm:$0xff]
    %v38 = vld [vmem:[%s1 + $0x90] sm:$0xff]
    %v39 = vld [vmem:[%s1 + $0x98] sm:$0xff]
    %v40 = vld [vmem:[%s1 + $0xa0] sm:$0xff]
    %v41 = vld [vmem:[%s1 + $0xa8] sm:$0xff]
    %v42 = vld [vmem:[%s1 + $0xb0] sm:$0xff]
    %v43 = vld [vmem:[%s1 + $0xb8] sm:$0xff]
    %v44 = vld [vmem:[%s1 + $0xc0] sm:$0xff]
    %v45 = vld [vmem:[%s1 + $0xc8] sm:$0xff]
    %v46 = vld [vmem:[%s1 + $0xd0] sm:$0xff]
    %v47 = vld [vmem:[%s1 + $0xd8] sm:$0xff]
    %v48 = vld [vmem:[%s1 + $0xe0] sm:$0xff]
    %v49 = vld [vmem:[%s1 + $0xe8] sm:$0xff]
    %v50 = vld [vmem:[%s1 + $0xf0] sm:$0xff]
    %v51 = vld [vmem:[%s1 + $0xf8] sm:$0xff]
    %vm52 = vcmask 261120
    %v54 = vsel %vm52, %v12, 0
    %56 = vmatprep.subr.mxu0 0.0
    %57 = vmatpush1.msra.mxu0 %v20
    %58 = vmatprep.subr.mxu0 0.0
    %59 = vmatpush1.msra.mxu0 %v21
    %60 = vmatprep.subr.mxu0 0.0
    %61 = vmatpush1.msra.mxu0 %v22
    %62 = vmatprep.subr.mxu0 0.0
    %63 = vmatpush1.msra.mxu0 %v23
    %64 = vmatprep.subr.mxu0 0.0
    %65 = vmatpush1.msra.mxu0 0.0
    %66 = vmatprep.subr.mxu0 0.0
    %67 = vmatpush1.msra.mxu0 0.0
    %68 = vmatprep.subr.mxu0 0.0
    %69 = vmatpush1.msra.mxu0 0.0
    %70 = vmatprep.subr.mxu0 0.0
    %71 = vmatpush1.msra.mxu0 0.0
    %72 = vmatprep.subr.mxu0 0.0
    %73 = vmatpush1.msra.mxu0 0.0
    %74 = vmatprep.subr.mxu0 0.0
    %75 = vmatpush1.msra.mxu0 0.0
    %76 = vmatprep.subr.mxu0 0.0
    %77 = vmatpush1.msra.mxu0 0.0
    %78 = vmatprep.subr.mxu0 0.0
    %79 = vmatpush1.msra.mxu0 0.0
    %80 = vmatprep.subr.mxu0 0.0
    %81 = vmatpush1.msra.mxu0 0.0
    %82 = vmatprep.subr.mxu0 0.0
    %83 = vmatpush1.msra.mxu0 0.0
    %84 = vmatprep.subr.mxu0 0.0
    %85 = vmatpush1.msra.mxu0 0.0
    %86 = vmatprep.subr.mxu0 0.0
    %87 = vmatpush1.msra.mxu0 0.0
    %88 = vmatprep.subr.mxu0 0.0
    %89 = vmatpush1.msra.mxu0 0.0
    %90 = vmatprep.subr.mxu0 0.0
    %91 = vmatpush1.msra.mxu0 0.0
    %92 = vmatprep.subr.mxu0 0.0
    %93 = vmatpush1.msra.mxu0 0.0
    %94 = vmatprep.subr.mxu0 0.0
    %95 = vmatpush1.msra.mxu0 0.0
    %96 = vmatprep.subr.mxu0 0.0
    %97 = vmatpush1.msra.mxu0 0.0
    %98 = vmatprep.subr.mxu0 0.0
    %99 = vmatpush1.msra.mxu0 0.0
    %100 = vmatprep.subr.mxu0 0.0
    %101 = vmatpush1.msra.mxu0 0.0
    %102 = vmatprep.subr.mxu0 0.0
    %103 = vmatpush1.msra.mxu0 0.0
    %104 = vmatprep.subr.mxu0 0.0
    %105 = vmatpush1.msra.mxu0 0.0
    %106 = vmatprep.subr.mxu0 0.0
    %107 = vmatpush1.msra.mxu0 0.0
    %108 = vmatprep.subr.mxu0 0.0
    %109 = vmatpush1.msra.mxu0 0.0
    %110 = vmatprep.subr.mxu0 0.0
    %111 = vmatpush1.msra.mxu0 0.0
    %112 = vmatprep.subr.mxu0 0.0
    %113 = vmatpush1.msra.mxu0 0.0
    %114 = vmatprep.subr.mxu0 0.0
    %115 = vmatpush1.msra.mxu0 0.0
    %116 = vmatprep.subr.mxu0 0.0
    %117 = vmatpush1.msra.mxu0 0.0
    %118 = vmatprep.subr.mxu0 0.0
    %119 = vmatpush1.msra.mxu0 0.0
    %120 = vmatprep.mubr.f32.mxu0 0.0
    %121 = vmatmul.mubr.f32.gmra.mrb[0].mxu0 %v54
    %v122 = vpop.f32.mrb[0].mxu0
    %v123 = vadd.f32 0.0, %v122
    %v124 = vpop.f32.mrb[0].mxu0
    %125 = vdwg.mxu0
    %v127 = vsel %vm52, %v13, 0
    %129 = vmatprep.subr.mxu0 0.0
    %130 = vmatpush1.msra.mxu0 %v24
    %131 = vmatprep.subr.mxu0 0.0
    %132 = vmatpush1.msra.mxu0 %v25
    %133 = vmatprep.subr.mxu0 0.0
    %134 = vmatpush1.msra.mxu0 %v26
    %135 = vmatprep.subr.mxu0 0.0
    %136 = vmatpush1.msra.mxu0 %v27
    %137 = vmatprep.subr.mxu0 0.0
    %138 = vmatpush1.msra.mxu0 0.0
    %139 = vmatprep.subr.mxu0 0.0
    %140 = vmatpush1.msra.mxu0 0.0
    %141 = vmatprep.subr.mxu0 0.0
    %142 = vmatpush1.msra.mxu0 0.0
    %143 = vmatprep.subr.mxu0 0.0
    %144 = vmatpush1.msra.mxu0 0.0
    %145 = vmatprep.subr.mxu0 0.0
    %146 = vmatpush1.msra.mxu0 0.0
    %147 = vmatprep.subr.mxu0 0.0
    %148 = vmatpush1.msra.mxu0 0.0
    %149 = vmatprep.subr.mxu0 0.0
    %150 = vmatpush1.msra.mxu0 0.0
    %151 = vmatprep.subr.mxu0 0.0
    %152 = vmatpush1.msra.mxu0 0.0
    %153 = vmatprep.subr.mxu0 0.0
    %154 = vmatpush1.msra.mxu0 0.0
    %155 = vmatprep.subr.mxu0 0.0
    %156 = vmatpush1.msra.mxu0 0.0
    %157 = vmatprep.subr.mxu0 0.0
    %158 = vmatpush1.msra.mxu0 0.0
    %159 = vmatprep.subr.mxu0 0.0
    %160 = vmatpush1.msra.mxu0 0.0
    %161 = vmatprep.subr.mxu0 0.0
    %162 = vmatpush1.msra.mxu0 0.0
    %163 = vmatprep.subr.mxu0 0.0
    %164 = vmatpush1.msra.mxu0 0.0
    %165 = vmatprep.subr.mxu0 0.0
    %166 = vmatpush1.msra.mxu0 0.0
    %167 = vmatprep.subr.mxu0 0.0
    %168 = vmatpush1.msra.mxu0 0.0
    %169 = vmatprep.subr.mxu0 0.0
    %170 = vmatpush1.msra.mxu0 0.0
    %171 = vmatprep.subr.mxu0 0.0
    %172 = vmatpush1.msra.mxu0 0.0
    %173 = vmatprep.subr.mxu0 0.0
    %174 = vmatpush1.msra.mxu0 0.0
    %175 = vmatprep.subr.mxu0 0.0
    %176 = vmatpush1.msra.mxu0 0.0
    %177 = vmatprep.subr.mxu0 0.0
    %178 = vmatpush1.msra.mxu0 0.0
    %179 = vmatprep.subr.mxu0 0.0
    %180 = vmatpush1.msra.mxu0 0.0
    %181 = vmatprep.subr.mxu0 0.0
    %182 = vmatpush1.msra.mxu0 0.0
    %183 = vmatprep.subr.mxu0 0.0
    %184 = vmatpush1.msra.mxu0 0.0
    %185 = vmatprep.subr.mxu0 0.0
    %186 = vmatpush1.msra.mxu0 0.0
    %187 = vmatprep.subr.mxu0 0.0
    %188 = vmatpush1.msra.mxu0 0.0
    %189 = vmatprep.subr.mxu0 0.0
    %190 = vmatpush1.msra.mxu0 0.0
    %191 = vmatprep.subr.mxu0 0.0
    %192 = vmatpush1.msra.mxu0 0.0
    %193 = vmatprep.mubr.f32.mxu0 0.0
    %194 = vmatmul.mubr.f32.gmra.mrb[0].mxu0 %v127
    %v195 = vpop.f32.mrb[0].mxu0
    %v196 = vadd.f32 0.0, %v195
    %v197 = vpop.f32.mrb[0].mxu0
    %198 = vdwg.mxu0
    %v200 = vsel %vm52, %v14, 0
    %202 = vmatprep.subr.mxu0 0.0
    %203 = vmatpush1.msra.mxu0 %v28
    %204 = vmatprep.subr.mxu0 0.0
    %205 = vmatpush1.msra.mxu0 %v29
    %206 = vmatprep.subr.mxu0 0.0
    %207 = vmatpush1.msra.mxu0 %v30
    %208 = vmatprep.subr.mxu0 0.0
    %209 = vmatpush1.msra.mxu0 %v31
    %210 = vmatprep.subr.mxu0 0.0
    %211 = vmatpush1.msra.mxu0 0.0
    %212 = vmatprep.subr.mxu0 0.0
    %213 = vmatpush1.msra.mxu0 0.0
    %214 = vmatprep.subr.mxu0 0.0
    %215 = vmatpush1.msra.mxu0 0.0
    %216 = vmatprep.subr.mxu0 0.0
    %217 = vmatpush1.msra.mxu0 0.0
    %218 = vmatprep.subr.mxu0 0.0
    %219 = vmatpush1.msra.mxu0 0.0
    %220 = vmatprep.subr.mxu0 0.0
    %221 = vmatpush1.msra.mxu0 0.0
    %222 = vmatprep.subr.mxu0 0.0
    %223 = vmatpush1.msra.mxu0 0.0
    %224 = vmatprep.subr.mxu0 0.0
    %225 = vmatpush1.msra.mxu0 0.0
    %226 = vmatprep.subr.mxu0 0.0
    %227 = vmatpush1.msra.mxu0 0.0
    %228 = vmatprep.subr.mxu0 0.0
    %229 = vmatpush1.msra.mxu0 0.0
    %230 = vmatprep.subr.mxu0 0.0
    %231 = vmatpush1.msra.mxu0 0.0
    %232 = vmatprep.subr.mxu0 0.0
    %233 = vmatpush1.msra.mxu0 0.0
    %234 = vmatprep.subr.mxu0 0.0
    %235 = vmatpush1.msra.mxu0 0.0
    %236 = vmatprep.subr.mxu0 0.0
    %237 = vmatpush1.msra.mxu0 0.0
    %238 = vmatprep.subr.mxu0 0.0
    %239 = vmatpush1.msra.mxu0 0.0
    %240 = vmatprep.subr.mxu0 0.0
    %241 = vmatpush1.msra.mxu0 0.0
    %242 = vmatprep.subr.mxu0 0.0
    %243 = vmatpush1.msra.mxu0 0.0
    %244 = vmatprep.subr.mxu0 0.0
    %245 = vmatpush1.msra.mxu0 0.0
    %246 = vmatprep.subr.mxu0 0.0
    %247 = vmatpush1.msra.mxu0 0.0
    %248 = vmatprep.subr.mxu0 0.0
    %249 = vmatpush1.msra.mxu0 0.0
    %250 = vmatprep.subr.mxu0 0.0
    %251 = vmatpush1.msra.mxu0 0.0
    %252 = vmatprep.subr.mxu0 0.0
    %253 = vmatpush1.msra.mxu0 0.0
    %254 = vmatprep.subr.mxu0 0.0
    %255 = vmatpush1.msra.mxu0 0.0
    %256 = vmatprep.subr.mxu0 0.0
    %257 = vmatpush1.msra.mxu0 0.0
    %258 = vmatprep.subr.mxu0 0.0
    %259 = vmatpush1.msra.mxu0 0.0
    %260 = vmatprep.subr.mxu0 0.0
    %261 = vmatpush1.msra.mxu0 0.0
    %262 = vmatprep.subr.mxu0 0.0
    %263 = vmatpush1.msra.mxu0 0.0
    %264 = vmatprep.subr.mxu0 0.0
    %265 = vmatpush1.msra.mxu0 0.0
    %266 = vmatprep.mubr.f32.mxu0 0.0
    %267 = vmatmul.mubr.f32.gmra.mrb[0].mxu0 %v200
    %v268 = vpop.f32.mrb[0].mxu0
    %v269 = vadd.f32 0.0, %v268
    %v270 = vpop.f32.mrb[0].mxu0
    %271 = vdwg.mxu0
    %v273 = vsel %vm52, %v15, 0
    %275 = vmatprep.subr.mxu0 0.0
    %276 = vmatpush1.msra.mxu0 %v32
    %277 = vmatprep.subr.mxu0 0.0
    %278 = vmatpush1.msra.mxu0 %v33
    %279 = vmatprep.subr.mxu0 0.0
    %280 = vmatpush1.msra.mxu0 %v34
    %281 = vmatprep.subr.mxu0 0.0
    %282 = vmatpush1.msra.mxu0 %v35
    %283 = vmatprep.subr.mxu0 0.0
    %284 = vmatpush1.msra.mxu0 0.0
    %285 = vmatprep.subr.mxu0 0.0
    %286 = vmatpush1.msra.mxu0 0.0
    %287 = vmatprep.subr.mxu0 0.0
    %288 = vmatpush1.msra.mxu0 0.0
    %289 = vmatprep.subr.mxu0 0.0
    %290 = vmatpush1.msra.mxu0 0.0
    %291 = vmatprep.subr.mxu0 0.0
    %292 = vmatpush1.msra.mxu0 0.0
    %293 = vmatprep.subr.mxu0 0.0
    %294 = vmatpush1.msra.mxu0 0.0
    %295 = vmatprep.subr.mxu0 0.0
    %296 = vmatpush1.msra.mxu0 0.0
    %297 = vmatprep.subr.mxu0 0.0
    %298 = vmatpush1.msra.mxu0 0.0
    %299 = vmatprep.subr.mxu0 0.0
    %300 = vmatpush1.msra.mxu0 0.0
    %301 = vmatprep.subr.mxu0 0.0
    %302 = vmatpush1.msra.mxu0 0.0
    %303 = vmatprep.subr.mxu0 0.0
    %304 = vmatpush1.msra.mxu0 0.0
    %305 = vmatprep.subr.mxu0 0.0
    %306 = vmatpush1.msra.mxu0 0.0
    %307 = vmatprep.subr.mxu0 0.0
    %308 = vmatpush1.msra.mxu0 0.0
    %309 = vmatprep.subr.mxu0 0.0
    %310 = vmatpush1.msra.mxu0 0.0
    %311 = vmatprep.subr.mxu0 0.0
    %312 = vmatpush1.msra.mxu0 0.0
    %313 = vmatprep.subr.mxu0 0.0
    %314 = vmatpush1.msra.mxu0 0.0
    %315 = vmatprep.subr.mxu0 0.0
    %316 = vmatpush1.msra.mxu0 0.0
    %317 = vmatprep.subr.mxu0 0.0
    %318 = vmatpush1.msra.mxu0 0.0
    %319 = vmatprep.subr.mxu0 0.0
    %320 = vmatpush1.msra.mxu0 0.0
    %321 = vmatprep.subr.mxu0 0.0
    %322 = vmatpush1.msra.mxu0 0.0
    %323 = vmatprep.subr.mxu0 0.0
    %324 = vmatpush1.msra.mxu0 0.0
    %325 = vmatprep.subr.mxu0 0.0
    %326 = vmatpush1.msra.mxu0 0.0
    %327 = vmatprep.subr.mxu0 0.0
    %328 = vmatpush1.msra.mxu0 0.0
    %329 = vmatprep.subr.mxu0 0.0
    %330 = vmatpush1.msra.mxu0 0.0
    %331 = vmatprep.subr.mxu0 0.0
    %332 = vmatpush1.msra.mxu0 0.0
    %333 = vmatprep.subr.mxu0 0.0
    %334 = vmatpush1.msra.mxu0 0.0
    %335 = vmatprep.subr.mxu0 0.0
    %336 = vmatpush1.msra.mxu0 0.0
    %337 = vmatprep.subr.mxu0 0.0
    %338 = vmatpush1.msra.mxu0 0.0
    %339 = vmatprep.mubr.f32.mxu0 0.0
    %340 = vmatmul.mubr.f32.gmra.mrb[0].mxu0 %v273
    %v341 = vpop.f32.mrb[0].mxu0
    %v342 = vadd.f32 0.0, %v341
    %v343 = vpop.f32.mrb[0].mxu0
    %344 = vdwg.mxu0
    %v346 = vsel %vm52, %v16, 0
    %348 = vmatprep.subr.mxu0 0.0
    %349 = vmatpush1.msra.mxu0 %v36
    %350 = vmatprep.subr.mxu0 0.0
    %351 = vmatpush1.msra.mxu0 %v37
    %352 = vmatprep.subr.mxu0 0.0
    %353 = vmatpush1.msra.mxu0 %v38
    %354 = vmatprep.subr.mxu0 0.0
    %355 = vmatpush1.msra.mxu0 %v39
    %356 = vmatprep.subr.mxu0 0.0
    %357 = vmatpush1.msra.mxu0 0.0
    %358 = vmatprep.subr.mxu0 0.0
    %359 = vmatpush1.msra.mxu0 0.0
    %360 = vmatprep.subr.mxu0 0.0
    %361 = vmatpush1.msra.mxu0 0.0
    %362 = vmatprep.subr.mxu0 0.0
    %363 = vmatpush1.msra.mxu0 0.0
    %364 = vmatprep.subr.mxu0 0.0
    %365 = vmatpush1.msra.mxu0 0.0
    %366 = vmatprep.subr.mxu0 0.0
    %367 = vmatpush1.msra.mxu0 0.0
    %368 = vmatprep.subr.mxu0 0.0
    %369 = vmatpush1.msra.mxu0 0.0
    %370 = vmatprep.subr.mxu0 0.0
    %371 = vmatpush1.msra.mxu0 0.0
    %372 = vmatprep.subr.mxu0 0.0
    %373 = vmatpush1.msra.mxu0 0.0
    %374 = vmatprep.subr.mxu0 0.0
    %375 = vmatpush1.msra.mxu0 0.0
    %376 = vmatprep.subr.mxu0 0.0
    %377 = vmatpush1.msra.mxu0 0.0
    %378 = vmatprep.subr.mxu0 0.0
    %379 = vmatpush1.msra.mxu0 0.0
    %380 = vmatprep.subr.mxu0 0.0
    %381 = vmatpush1.msra.mxu0 0.0
    %382 = vmatprep.subr.mxu0 0.0
    %383 = vmatpush1.msra.mxu0 0.0
    %384 = vmatprep.subr.mxu0 0.0
    %385 = vmatpush1.msra.mxu0 0.0
    %386 = vmatprep.subr.mxu0 0.0
    %387 = vmatpush1.msra.mxu0 0.0
    %388 = vmatprep.subr.mxu0 0.0
    %389 = vmatpush1.msra.mxu0 0.0
    %390 = vmatprep.subr.mxu0 0.0
    %391 = vmatpush1.msra.mxu0 0.0
    %392 = vmatprep.subr.mxu0 0.0
    %393 = vmatpush1.msra.mxu0 0.0
    %394 = vmatprep.subr.mxu0 0.0
    %395 = vmatpush1.msra.mxu0 0.0
    %396 = vmatprep.subr.mxu0 0.0
    %397 = vmatpush1.msra.mxu0 0.0
    %398 = vmatprep.subr.mxu0 0.0
    %399 = vmatpush1.msra.mxu0 0.0
    %400 = vmatprep.subr.mxu0 0.0
    %401 = vmatpush1.msra.mxu0 0.0
    %402 = vmatprep.subr.mxu0 0.0
    %403 = vmatpush1.msra.mxu0 0.0
    %404 = vmatprep.subr.mxu0 0.0
    %405 = vmatpush1.msra.mxu0 0.0
    %406 = vmatprep.subr.mxu0 0.0
    %407 = vmatpush1.msra.mxu0 0.0
    %408 = vmatprep.subr.mxu0 0.0
    %409 = vmatpush1.msra.mxu0 0.0
    %410 = vmatprep.subr.mxu0 0.0
    %411 = vmatpush1.msra.mxu0 0.0
    %412 = vmatprep.mubr.f32.mxu0 0.0
    %413 = vmatmul.mubr.f32.gmra.mrb[0].mxu0 %v346
    %v414 = vpop.f32.mrb[0].mxu0
    %v415 = vadd.f32 0.0, %v414
    %v416 = vpop.f32.mrb[0].mxu0
    %417 = vdwg.mxu0
    %v419 = vsel %vm52, %v17, 0
    %421 = vmatprep.subr.mxu0 0.0
    %422 = vmatpush1.msra.mxu0 %v40
    %423 = vmatprep.subr.mxu0 0.0
    %424 = vmatpush1.msra.mxu0 %v41
    %425 = vmatprep.subr.mxu0 0.0
    %426 = vmatpush1.msra.mxu0 %v42
    %427 = vmatprep.subr.mxu0 0.0
    %428 = vmatpush1.msra.mxu0 %v43
    %429 = vmatprep.subr.mxu0 0.0
    %430 = vmatpush1.msra.mxu0 0.0
    %431 = vmatprep.subr.mxu0 0.0
    %432 = vmatpush1.msra.mxu0 0.0
    %433 = vmatprep.subr.mxu0 0.0
    %434 = vmatpush1.msra.mxu0 0.0
    %435 = vmatprep.subr.mxu0 0.0
    %436 = vmatpush1.msra.mxu0 0.0
    %437 = vmatprep.subr.mxu0 0.0
    %438 = vmatpush1.msra.mxu0 0.0
    %439 = vmatprep.subr.mxu0 0.0
    %440 = vmatpush1.msra.mxu0 0.0
    %441 = vmatprep.subr.mxu0 0.0
    %442 = vmatpush1.msra.mxu0 0.0
    %443 = vmatprep.subr.mxu0 0.0
    %444 = vmatpush1.msra.mxu0 0.0
    %445 = vmatprep.subr.mxu0 0.0
    %446 = vmatpush1.msra.mxu0 0.0
    %447 = vmatprep.subr.mxu0 0.0
    %448 = vmatpush1.msra.mxu0 0.0
    %449 = vmatprep.subr.mxu0 0.0
    %450 = vmatpush1.msra.mxu0 0.0
    %451 = vmatprep.subr.mxu0 0.0
    %452 = vmatpush1.msra.mxu0 0.0
    %453 = vmatprep.subr.mxu0 0.0
    %454 = vmatpush1.msra.mxu0 0.0
    %455 = vmatprep.subr.mxu0 0.0
    %456 = vmatpush1.msra.mxu0 0.0
    %457 = vmatprep.subr.mxu0 0.0
    %458 = vmatpush1.msra.mxu0 0.0
    %459 = vmatprep.subr.mxu0 0.0
    %460 = vmatpush1.msra.mxu0 0.0
    %461 = vmatprep.subr.mxu0 0.0
    %462 = vmatpush1.msra.mxu0 0.0
    %463 = vmatprep.subr.mxu0 0.0
    %464 = vmatpush1.msra.mxu0 0.0
    %465 = vmatprep.subr.mxu0 0.0
    %466 = vmatpush1.msra.mxu0 0.0
    %467 = vmatprep.subr.mxu0 0.0
    %468 = vmatpush1.msra.mxu0 0.0
    %469 = vmatprep.subr.mxu0 0.0
    %470 = vmatpush1.msra.mxu0 0.0
    %471 = vmatprep.subr.mxu0 0.0
    %472 = vmatpush1.msra.mxu0 0.0
    %473 = vmatprep.subr.mxu0 0.0
    %474 = vmatpush1.msra.mxu0 0.0
    %475 = vmatprep.subr.mxu0 0.0
    %476 = vmatpush1.msra.mxu0 0.0
    %477 = vmatprep.subr.mxu0 0.0
    %478 = vmatpush1.msra.mxu0 0.0
    %479 = vmatprep.subr.mxu0 0.0
    %480 = vmatpush1.msra.mxu0 0.0
    %481 = vmatprep.subr.mxu0 0.0
    %482 = vmatpush1.msra.mxu0 0.0
    %483 = vmatprep.subr.mxu0 0.0
    %484 = vmatpush1.msra.mxu0 0.0
    %485 = vmatprep.mubr.f32.mxu0 0.0
    %486 = vmatmul.mubr.f32.gmra.mrb[0].mxu0 %v419
    %v487 = vpop.f32.mrb[0].mxu0
    %v488 = vadd.f32 0.0, %v487
    %v489 = vpop.f32.mrb[0].mxu0
    %490 = vdwg.mxu0
    %v492 = vsel %vm52, %v18, 0
    %494 = vmatprep.subr.mxu0 0.0
    %495 = vmatpush1.msra.mxu0 %v44
    %496 = vmatprep.subr.mxu0 0.0
    %497 = vmatpush1.msra.mxu0 %v45
    %498 = vmatprep.subr.mxu0 0.0
    %499 = vmatpush1.msra.mxu0 %v46
    %500 = vmatprep.subr.mxu0 0.0
    %501 = vmatpush1.msra.mxu0 %v47
    %502 = vmatprep.subr.mxu0 0.0
    %503 = vmatpush1.msra.mxu0 0.0
    %504 = vmatprep.subr.mxu0 0.0
    %505 = vmatpush1.msra.mxu0 0.0
    %506 = vmatprep.subr.mxu0 0.0
    %507 = vmatpush1.msra.mxu0 0.0
    %508 = vmatprep.subr.mxu0 0.0
    %509 = vmatpush1.msra.mxu0 0.0
    %510 = vmatprep.subr.mxu0 0.0
    %511 = vmatpush1.msra.mxu0 0.0
    %512 = vmatprep.subr.mxu0 0.0
    %513 = vmatpush1.msra.mxu0 0.0
    %514 = vmatprep.subr.mxu0 0.0
    %515 = vmatpush1.msra.mxu0 0.0
    %516 = vmatprep.subr.mxu0 0.0
    %517 = vmatpush1.msra.mxu0 0.0
    %518 = vmatprep.subr.mxu0 0.0
    %519 = vmatpush1.msra.mxu0 0.0
    %520 = vmatprep.subr.mxu0 0.0
    %521 = vmatpush1.msra.mxu0 0.0
    %522 = vmatprep.subr.mxu0 0.0
    %523 = vmatpush1.msra.mxu0 0.0
    %524 = vmatprep.subr.mxu0 0.0
    %525 = vmatpush1.msra.mxu0 0.0
    %526 = vmatprep.subr.mxu0 0.0
    %527 = vmatpush1.msra.mxu0 0.0
    %528 = vmatprep.subr.mxu0 0.0
    %529 = vmatpush1.msra.mxu0 0.0
    %530 = vmatprep.subr.mxu0 0.0
    %531 = vmatpush1.msra.mxu0 0.0
    %532 = vmatprep.subr.mxu0 0.0
    %533 = vmatpush1.msra.mxu0 0.0
    %534 = vmatprep.subr.mxu0 0.0
    %535 = vmatpush1.msra.mxu0 0.0
    %536 = vmatprep.subr.mxu0 0.0
    %537 = vmatpush1.msra.mxu0 0.0
    %538 = vmatprep.subr.mxu0 0.0
    %539 = vmatpush1.msra.mxu0 0.0
    %540 = vmatprep.subr.mxu0 0.0
    %541 = vmatpush1.msra.mxu0 0.0
    %542 = vmatprep.subr.mxu0 0.0
    %543 = vmatpush1.msra.mxu0 0.0
    %544 = vmatprep.subr.mxu0 0.0
    %545 = vmatpush1.msra.mxu0 0.0
    %546 = vmatprep.subr.mxu0 0.0
    %547 = vmatpush1.msra.mxu0 0.0
    %548 = vmatprep.subr.mxu0 0.0
    %549 = vmatpush1.msra.mxu0 0.0
    %550 = vmatprep.subr.mxu0 0.0
    %551 = vmatpush1.msra.mxu0 0.0
    %552 = vmatprep.subr.mxu0 0.0
    %553 = vmatpush1.msra.mxu0 0.0
    %554 = vmatprep.subr.mxu0 0.0
    %555 = vmatpush1.msra.mxu0 0.0
    %556 = vmatprep.subr.mxu0 0.0
    %557 = vmatpush1.msra.mxu0 0.0
    %558 = vmatprep.mubr.f32.mxu0 0.0
    %559 = vmatmul.mubr.f32.gmra.mrb[0].mxu0 %v492
    %v560 = vpop.f32.mrb[0].mxu0
    %v561 = vadd.f32 0.0, %v560
    %v562 = vpop.f32.mrb[0].mxu0
    %563 = vdwg.mxu0
    %v565 = vsel %vm52, %v19, 0
    %567 = vmatprep.subr.mxu0 0.0
    %568 = vmatpush1.msra.mxu0 %v48
    %569 = vmatprep.subr.mxu0 0.0
    %570 = vmatpush1.msra.mxu0 %v49
    %571 = vmatprep.subr.mxu0 0.0
    %572 = vmatpush1.msra.mxu0 %v50
    %573 = vmatprep.subr.mxu0 0.0
    %574 = vmatpush1.msra.mxu0 %v51
    %575 = vmatprep.subr.mxu0 0.0
    %576 = vmatpush1.msra.mxu0 0.0
    %577 = vmatprep.subr.mxu0 0.0
    %578 = vmatpush1.msra.mxu0 0.0
    %579 = vmatprep.subr.mxu0 0.0
    %580 = vmatpush1.msra.mxu0 0.0
    %581 = vmatprep.subr.mxu0 0.0
    %582 = vmatpush1.msra.mxu0 0.0
    %583 = vmatprep.subr.mxu0 0.0
    %584 = vmatpush1.msra.mxu0 0.0
    %585 = vmatprep.subr.mxu0 0.0
    %586 = vmatpush1.msra.mxu0 0.0
    %587 = vmatprep.subr.mxu0 0.0
    %588 = vmatpush1.msra.mxu0 0.0
    %589 = vmatprep.subr.mxu0 0.0
    %590 = vmatpush1.msra.mxu0 0.0
    %591 = vmatprep.subr.mxu0 0.0
    %592 = vmatpush1.msra.mxu0 0.0
    %593 = vmatprep.subr.mxu0 0.0
    %594 = vmatpush1.msra.mxu0 0.0
    %595 = vmatprep.subr.mxu0 0.0
    %596 = vmatpush1.msra.mxu0 0.0
    %597 = vmatprep.subr.mxu0 0.0
    %598 = vmatpush1.msra.mxu0 0.0
    %599 = vmatprep.subr.mxu0 0.0
    %600 = vmatpush1.msra.mxu0 0.0
    %601 = vmatprep.subr.mxu0 0.0
    %602 = vmatpush1.msra.mxu0 0.0
    %603 = vmatprep.subr.mxu0 0.0
    %604 = vmatpush1.msra.mxu0 0.0
    %605 = vmatprep.subr.mxu0 0.0
    %606 = vmatpush1.msra.mxu0 0.0
    %607 = vmatprep.subr.mxu0 0.0
    %608 = vmatpush1.msra.mxu0 0.0
    %609 = vmatprep.subr.mxu0 0.0
    %610 = vmatpush1.msra.mxu0 0.0
    %611 = vmatprep.subr.mxu0 0.0
    %612 = vmatpush1.msra.mxu0 0.0
    %613 = vmatprep.subr.mxu0 0.0
    %614 = vmatpush1.msra.mxu0 0.0
    %615 = vmatprep.subr.mxu0 0.0
    %616 = vmatpush1.msra.mxu0 0.0
    %617 = vmatprep.subr.mxu0 0.0
    %618 = vmatpush1.msra.mxu0 0.0
    %619 = vmatprep.subr.mxu0 0.0
    %620 = vmatpush1.msra.mxu0 0.0
    %621 = vmatprep.subr.mxu0 0.0
    %622 = vmatpush1.msra.mxu0 0.0
    %623 = vmatprep.subr.mxu0 0.0
    %624 = vmatpush1.msra.mxu0 0.0
    %625 = vmatprep.subr.mxu0 0.0
    %626 = vmatpush1.msra.mxu0 0.0
    %627 = vmatprep.subr.mxu0 0.0
    %628 = vmatpush1.msra.mxu0 0.0
    %629 = vmatprep.subr.mxu0 0.0
    %630 = vmatpush1.msra.mxu0 0.0
    %631 = vmatprep.mubr.f32.mxu0 0.0
    %632 = vmatmul.mubr.f32.gmra.mrb[0].mxu0 %v565
    %v633 = vpop.f32.mrb[0].mxu0
    %v634 = vadd.f32 0.0, %v633
    %v635 = vpop.f32.mrb[0].mxu0
    %636 = vdwg.mxu0
    %vm637 = vcmask 64512
    %638 = vst.msk [vmem:[#allocation2] sm:$0xff] %vm637, %v123
    %639 = vst.msk [vmem:[#allocation2 + $0x8] sm:$0xff] %vm637, %v196
    %640 = vst.msk [vmem:[#allocation2 + $0x10] sm:$0xff] %vm637, %v269
    %641 = vst.msk [vmem:[#allocation2 + $0x18] sm:$0xff] %vm637, %v342
    %642 = vst.msk [vmem:[#allocation2 + $0x20] sm:$0xff] %vm637, %v415
    %643 = vst.msk [vmem:[#allocation2 + $0x28] sm:$0xff] %vm637, %v488
    %644 = vst.msk [vmem:[#allocation2 + $0x30] sm:$0xff] %vm637, %v561
    %645 = vst.msk [vmem:[#allocation2 + $0x38] sm:$0xff] %vm637, %v634
    // Predicated region
    $region10: #{tpu_custom_call.1} parent=1 // pred_check
      _
    $region11: #{tpu_custom_call.1} parent=1 // pred_check_branch
      %647 = sbr.rel (0) target = $region13
    $region12: #{tpu_custom_call.1} parent=1 // pred_region
      %s649 = ssub.s32 1024, 1024
      %650 = vsyncadd [#allocation3], %s649
      %s651 = sshll.u32 [#allocation2], 4
      %s652 = int_to_ptr.vmem [resolvable:$true] %s651
      %657 = dma.vmem_to_hbm [thread:$0]  %s652, 1024, %s2, [#allocation3], 128, 128, 8
    $region13: #{tpu_custom_call.1} parent=1 // pred_fallthru
      _
    // Predicated region
    $region14: #{tpu_custom_call.1} parent=1 // pred_check
      _
    $region15: #{tpu_custom_call.1} parent=1 // pred_check_branch
      %659 = sbr.rel (0) target = $region17
    $region16: #{tpu_custom_call.1} parent=1 // pred_region
      %660 = dma.done [#allocation3], 1024
    $region17: #{tpu_custom_call.1} parent=1 // pred_fallthru
      _
    %661 = vsyncpa [#allocation3], 1

</llo_original>
